<compile_context>
chip_gen: v6e
topology: v6e:2x2x1
jax: 0.10.0
libtpu: 0.0.40
codegen_flags: <defaults>
</compile_context>

<pallas_src>
import jax
import jax.numpy as jnp
from jax import lax
from jax.experimental import pallas as pl
from jax.experimental.pallas import tpu as pltpu


# ---------------------------------------------------------------------------
# VMEM sizing / tiling helpers.
# ---------------------------------------------------------------------------

_DEFAULT_VMEM_CAPACITY = 64 * 1024 * 1024  # conservative: v7x per-core VMEM


def _vmem_capacity_bytes():
    """Physical per-core VMEM (128 MiB on v5e/v6e, 64 MiB on v7x)."""
    try:
        cap = int(pltpu.get_tpu_info().vmem_capacity_bytes)
        if cap > 0:
            return cap
    except Exception:
        pass
    return _DEFAULT_VMEM_CAPACITY


def _choose_block_q(Lq, Lk, D, Dv, itemsize, budget):
    """Largest Lq tile (multiple of 8 dividing Lq, capped at 1024) whose
    per-step working set -- resident K/V, pipelined Q/result/attn blocks and
    the in-kernel f32 softmax intermediates -- fits `budget`.  Returns None
    when even tq=8 does not fit (caller switches to the KV-tiled path)."""
    # K, V: counted as double-buffered even though we request pl.Buffered(1),
    # so the estimate stays safe if single-buffering is unavailable.
    fixed = 2 * Lk * (D + Dv) * itemsize
    per_row = (
        2 * (D + Dv + Lk) * itemsize   # Q / result / attn blocks (x2 buffers)
        + (2 * Lk + D + Dv) * 4        # f32 scores / exp / matmul temporaries
        + Lk * itemsize                # attn cast copy before the store
    )
    cands = [c for c in range(8, min(Lq, 1024) + 1, 8) if Lq % c == 0]
    if not cands:
        cands = [Lq]                   # full-extent block is always legal
    best = None
    for c in cands:
        if fixed + c * per_row <= budget:
            best = c
    return best


def _choose_kv_tiles(Lq, Lk, D, Dv, itemsize, budget):
    """Pick (tq, tk) for the two-pass KV-tiled path.  tk is a multiple of 128
    dividing Lk (lane-dense attn stores).  Returns None if no such tk exists
    or nothing fits."""
    tk = None
    for cand in (512, 256, 128):
        if Lk % cand == 0:
            tk = cand
            break
    if tk is None:
        return None

    def fits(tq):
        kv_blocks = 2 * tk * (D + Dv) * itemsize     # K, V (double-buffered)
        q_out = 2 * tq * (D + Dv) * itemsize         # Q + result blocks
        attn_blk = 2 * tq * tk * itemsize            # attn tiles
        stats = 2 * 2 * tq * 4                       # m, l blocks
        inter = tq * (2 * tk + D + Dv) * 4 + tq * tk * itemsize
        acc = tq * Dv * 4                            # f32 accumulator scratch
        return kv_blocks + q_out + attn_blk + stats + inter + acc <= budget

    cands = [c for c in range(8, min(Lq, 1024) + 1, 8) if Lq % c == 0]
    if not cands:
        cands = [Lq]
    best = None
    for c in cands:
        if fits(c):
            best = c
    if best is None:
        return None
    return best, tk


def _megacore_guard(tq, B, Lq):
    """Keep >= 2 independent grid steps so both v7x TensorCores get work at
    small batch.  No effect on v5e/v6e (single TC) beyond a smaller tile."""
    if B * (Lq // tq) >= 2 or Lq < 16:
        return tq
    cands = [c for c in range(8, Lq // 2 + 1, 8) if Lq % c == 0]
    return cands[-1] if cands else tq


def _spec(block_shape, index_map, buffer_count=None):
    """BlockSpec with an optional pipeline buffer-count override; falls back
    to the default (double-buffered) spec if pipeline_mode is unsupported."""
    if buffer_count is not None:
        try:
            return pl.BlockSpec(block_shape, index_map,
                                pipeline_mode=pl.Buffered(buffer_count))
        except Exception:
            pass
    return pl.BlockSpec(block_shape, index_map)


# ---------------------------------------------------------------------------
# Path 1: resident K/V, Q tiled along Lq.
# ---------------------------------------------------------------------------

def _attention_kernel(q_ref, k_ref, v_ref, out_ref, attn_ref):
    # q_ref: (tq, D), k_ref: (Lk, D), v_ref: (Lk, Dv)   (batch dim squeezed)
    q = q_ref[...]
    k = k_ref[...]
    v = v_ref[...]

    # scores = Q @ K^T as a contraction over the D axis of both operands so
    # the MXU consumes K untransposed (no explicit .T / XLU relayout).
    s = lax.dot_general(q, k, (((1,), (1,)), ((), ())),
                        preferred_element_type=jnp.float32)

    # Numerically-stable softmax over the last axis, all math in f32.
    m = jnp.max(s, axis=-1, keepdims=True)
    e = jnp.exp(s - m)
    denom = jnp.sum(e, axis=-1, keepdims=True)
    # Exact reciprocal on a (tq, 1) tensor (VALU) -- negligible cost, keeps
    # 1e-5 parity with the reference softmax.
    attn = e * pl.reciprocal(denom, approx=False)

    attn_ref[...] = attn.astype(attn_ref.dtype)

    # result = attn @ V on the MXU, f32 accumulation.
    out_ref[...] = jnp.dot(attn.astype(v.dtype), v,
                           preferred_element_type=jnp.float32
                           ).astype(out_ref.dtype)


def _attention_resident_kv(queries, keys, values, tq, out_dtype, vmem_limit):
    B, Lq, D = queries.shape
    _, Lk, _ = keys.shape
    Dv = values.shape[-1]

    out_shapes = (
        jax.ShapeDtypeStruct((B, Lq, Dv), out_dtype),   # result
        jax.ShapeDtypeStruct((B, Lq, Lk), out_dtype),   # attn
    )

    def build(single_buffer_kv):
        kv_bufs = 1 if single_buffer_kv else None
        grid_spec = pltpu.PrefetchScalarGridSpec(
            num_scalar_prefetch=0,
            grid=(B, Lq // tq),
            in_specs=[
                # Q: tiled along Lq.
                pl.BlockSpec((pl.Squeezed(), tq, D), lambda b, i: (b, i, 0)),
                # K, V: constant across the Lq axis; single-buffering frees
                # their second (dead between batch changes) pipeline buffer.
                _spec((pl.Squeezed(), Lk, D), lambda b, i: (b, 0, 0),
                      buffer_count=kv_bufs),
                _spec((pl.Squeezed(), Lk, Dv), lambda b, i: (b, 0, 0),
                      buffer_count=kv_bufs),
            ],
            out_specs=[
                # NOTE: result's lane dim is Dv; when Dv < 128 these become
                # masked stores -- fold heads at the call site if possible.
                pl.BlockSpec((pl.Squeezed(), tq, Dv), lambda b, i: (b, i, 0)),
                pl.BlockSpec((pl.Squeezed(), tq, Lk), lambda b, i: (b, i, 0)),
            ],
        )
        return pl.pallas_call(
            _attention_kernel,
            out_shape=out_shapes,
            grid_spec=grid_spec,
            compiler_params=pltpu.CompilerParams(
                # Both axes independent -> megacore (v7x) can shard either.
                dimension_semantics=("parallel", "parallel"),
                vmem_limit_bytes=vmem_limit,
            ),
        )

    try:
        return build(True)(queries, keys, values)
    except Exception:
        # pl.Buffered(1) unsupported on this runtime -> default double buffer.
        return build(False)(queries, keys, values)


# ---------------------------------------------------------------------------
# Path 2: two-pass softmax with a KV grid axis (long Lk).
# ---------------------------------------------------------------------------

def _softmax_stats_kernel(q_ref, k_ref, m_ref, l_ref, m_sc, l_sc):
    # Pass 1: online row-max (m) and rescaled row-sum-of-exp (l) over kv.
    kv = pl.program_id(2)

    @pl.when(kv == 0)
    def _():
        m_sc[...] = jnp.full(m_sc.shape, -jnp.inf, dtype=m_sc.dtype)
        l_sc[...] = jnp.zeros(l_sc.shape, dtype=l_sc.dtype)

    s = lax.dot_general(q_ref[...], k_ref[...], (((1,), (1,)), ((), ())),
                        preferred_element_type=jnp.float32)
    m_prev = m_sc[...]
    m_new = jnp.maximum(m_prev, jnp.max(s, axis=-1, keepdims=True))
    l_sc[...] = (l_sc[...] * jnp.exp(m_prev - m_new)
                 + jnp.sum(jnp.exp(s - m_new), axis=-1, keepdims=True))
    m_sc[...] = m_new

    @pl.when(kv == pl.num_programs(2) - 1)
    def _():
        m_ref[...] = m_sc[...]
        l_ref[...] = l_sc[...]


def _attn_weighted_sum_kernel(q_ref, k_ref, v_ref, m_ref, l_ref,
                              out_ref, attn_ref, acc_ref):
    # Pass 2: normalized attn tiles + attn @ V accumulation across kv tiles.
    kv = pl.program_id(2)

    @pl.when(kv == 0)
    def _():
        acc_ref[...] = jnp.zeros_like(acc_ref)

    s = lax.dot_general(q_ref[...], k_ref[...], (((1,), (1,)), ((), ())),
                        preferred_element_type=jnp.float32)
    inv_l = pl.reciprocal(l_ref[...], approx=False)
    p = jnp.exp(s - m_ref[...]) * inv_l
    attn_ref[...] = p.astype(attn_ref.dtype)
    acc_ref[...] += jnp.dot(p.astype(v_ref.dtype), v_ref[...],
                            preferred_element_type=jnp.float32)

    @pl.when(kv == pl.num_programs(2) - 1)
    def _():
        out_ref[...] = acc_ref[...].astype(out_ref.dtype)


def _attention_kv_tiled(queries, keys, values, tq, tk, out_dtype, vmem_limit):
    B, Lq, D = queries.shape
    _, Lk, _ = keys.shape
    Dv = values.shape[-1]
    grid = (B, Lq // tq, Lk // tk)
    cparams = pltpu.CompilerParams(
        dimension_semantics=("parallel", "parallel", "arbitrary"),
        vmem_limit_bytes=vmem_limit,
    )

    # Pass 1: per-row softmax statistics (row max, row sum of exp).
    m, l = pl.pallas_call(
        _softmax_stats_kernel,
        out_shape=(jax.ShapeDtypeStruct((B, Lq, 1), jnp.float32),
                   jax.ShapeDtypeStruct((B, Lq, 1), jnp.float32)),
        grid_spec=pltpu.PrefetchScalarGridSpec(
            num_scalar_prefetch=0,
            grid=grid,
            in_specs=[
                pl.BlockSpec((pl.Squeezed(), tq, D),
                             lambda b, i, kv: (b, i, 0)),
                pl.BlockSpec((pl.Squeezed(), tk, D),
                             lambda b, i, kv: (b, kv, 0)),
            ],
            out_specs=[
                pl.BlockSpec((pl.Squeezed(), tq, 1),
                             lambda b, i, kv: (b, i, 0)),
                pl.BlockSpec((pl.Squeezed(), tq, 1),
                             lambda b, i, kv: (b, i, 0)),
            ],
            scratch_shapes=[pltpu.VMEM((tq, 1), jnp.float32),
                            pltpu.VMEM((tq, 1), jnp.float32)],
        ),
        compiler_params=cparams,
    )(queries, keys)

    # Pass 2: write normalized attn tiles and accumulate attn @ V.
    return pl.pallas_call(
        _attn_weighted_sum_kernel,
        out_shape=(jax.ShapeDtypeStruct((B, Lq, Dv), out_dtype),
                   jax.ShapeDtypeStruct((B, Lq, Lk), out_dtype)),
        grid_spec=pltpu.PrefetchScalarGridSpec(
            num_scalar_prefetch=0,
            grid=grid,
            in_specs=[
                pl.BlockSpec((pl.Squeezed(), tq, D),
                             lambda b, i, kv: (b, i, 0)),
                pl.BlockSpec((pl.Squeezed(), tk, D),
                             lambda b, i, kv: (b, kv, 0)),
                pl.BlockSpec((pl.Squeezed(), tk, Dv),
                             lambda b, i, kv: (b, kv, 0)),
                pl.BlockSpec((pl.Squeezed(), tq, 1),
                             lambda b, i, kv: (b, i, 0)),
                pl.BlockSpec((pl.Squeezed(), tq, 1),
                             lambda b, i, kv: (b, i, 0)),
            ],
            out_specs=[
                pl.BlockSpec((pl.Squeezed(), tq, Dv),
                             lambda b, i, kv: (b, i, 0)),
                pl.BlockSpec((pl.Squeezed(), tq, tk),
                             lambda b, i, kv: (b, i, kv)),
            ],
            scratch_shapes=[pltpu.VMEM((tq, Dv), jnp.float32)],
        ),
        compiler_params=cparams,
    )(queries, keys, values, m, l)


# ---------------------------------------------------------------------------
# Public wrapper.
# ---------------------------------------------------------------------------

def attention(queries, keys, values, *, compute_dtype=None,
              force_kv_tiled=False):
    """(result, attn), matching torch.bmm -> F.softmax(dim=-1) -> torch.bmm.

    compute_dtype: optionally run Q/K/V through the MXU in a narrower dtype
    (e.g. jnp.bfloat16 on v6e/v7x, whose MXUs are bf16-native); softmax math
    and matmul accumulation stay f32 and the outputs keep the input dtype.
    Default None preserves full-f32 compute for exact parity.
    """
    B, Lq, D = queries.shape
    Bk, Lk, Dk = keys.shape
    Bv, Lkv, Dv = values.shape
    assert B == Bk == Bv and D == Dk and Lk == Lkv

    out_dtype = queries.dtype
    if compute_dtype is not None:
        queries = queries.astype(compute_dtype)
        keys = keys.astype(compute_dtype)
        values = values.astype(compute_dtype)

    itemsize = max(jnp.dtype(queries.dtype).itemsize,
                   jnp.dtype(out_dtype).itemsize)

    # Per-generation VMEM sizing: ~70% of physical per-core VMEM as the
    # compiler limit, ~80% of that as the tile-selection budget (headroom for
    # compiler temporaries / alignment).  v5e/v6e: ~90/72 MiB; v7x: ~45/36.
    vmem_limit = int(_vmem_capacity_bytes() * 0.70)
    budget = int(vmem_limit * 0.80)

    tq = None if force_kv_tiled else _choose_block_q(
        Lq, Lk, D, Dv, itemsize, budget)

    if tq is None:
        kv_tiles = _choose_kv_tiles(Lq, Lk, D, Dv, itemsize, budget)
        if kv_tiles is not None:
            tq_kv, tk = kv_tiles
            tq_kv = _megacore_guard(tq_kv, B, Lq)
            return _attention_kv_tiled(queries, keys, values, tq_kv, tk,
                                       out_dtype, vmem_limit)
        # TODO(synk): pad Lk to a multiple of 128 so the KV-tiled path also
        # covers ragged long sequences; until then fall back to resident KV.
        if force_kv_tiled:
            tq = _choose_block_q(Lq, Lk, D, Dv, itemsize, budget)
        if tq is None:
            cands = [c for c in range(8, Lq + 1, 8) if Lq % c == 0]
            tq = cands[0] if cands else Lq

    tq = _megacore_guard(tq, B, Lq)
    return _attention_resident_kv(queries, keys, values, tq, out_dtype,
                                  vmem_limit)


def attention_ref(queries, keys, values):
    s = jnp.einsum("bqd,bkd->bqk", queries, keys)
    attn = jax.nn.softmax(s, axis=-1)
    result = jnp.einsum("bqk,bkd->bqd", attn, values)
    return result, attn


if __name__ == "__main__":
    key = jax.random.PRNGKey(0)
    kq, kk, kv = jax.random.split(key, 3)

    # Small-shape check on the resident-KV path (module layout: queries
    # (B, Lq, D), keys (B, Lk, D), values (B, Lk, Dv)).
    B, Lq, Lk, D, Dv = 2, 8, 8, 32, 32
    queries = jax.random.normal(kq, (B, Lq, D), dtype=jnp.float32)
    keys = jax.random.normal(kk, (B, Lk, D), dtype=jnp.float32)
    values = jax.random.normal(kv, (B, Lk, Dv), dtype=jnp.float32)

    result, attn = attention(queries, keys, values)
    result = jax.block_until_ready(result)
    attn = jax.block_until_ready(attn)
    ref_result, ref_attn = attention_ref(queries, keys, values)
    assert jnp.allclose(result, ref_result, atol=1e-5, rtol=1e-5)
    assert jnp.allclose(attn, ref_attn, atol=1e-5, rtol=1e-5)

    # Also exercise the long-Lk two-pass KV-tiled path (forced, so it is
    # covered even though these shapes would normally fit the resident path).
    B2, Lq2, Lk2, D2, Dv2 = 2, 128, 384, 64, 64
    k2 = jax.random.split(jax.random.PRNGKey(0), 3)
    q2 = jax.random.normal(k2[0], (B2, Lq2, D2), dtype=jnp.float32)
    kk2 = jax.random.normal(k2[1], (B2, Lk2, D2), dtype=jnp.float32)
    v2 = jax.random.normal(k2[2], (B2, Lk2, Dv2), dtype=jnp.float32)

    result2, attn2 = attention(q2, kk2, v2, force_kv_tiled=True)
    result2 = jax.block_until_ready(result2)
    attn2 = jax.block_until_ready(attn2)
    ref_result2, ref_attn2 = attention_ref(q2, kk2, v2)
    assert jnp.allclose(result2, ref_result2, atol=2e-5, rtol=2e-5)
    assert jnp.allclose(attn2, ref_attn2, atol=2e-5, rtol=2e-5)

    print("KERNEL_OK")
</pallas_src>

<mosaic_0001>
module attributes {stable_mosaic.version = 11 : i64} {
  func.func @_attention_kernel(%arg0: i32, %arg1: i32, %arg2: memref<1x8x32xf32, #tpu.memory_space<vmem>>, %arg3: memref<1x8x32xf32, #tpu.memory_space<vmem>>, %arg4: memref<1x8x32xf32, #tpu.memory_space<vmem>>, %arg5: memref<1x8x32xf32, #tpu.memory_space<vmem>>, %arg6: memref<1x8x8xf32, #tpu.memory_space<vmem>>) attributes {dimension_semantics = [#tpu.dimension_semantics<parallel>, #tpu.dimension_semantics<parallel>], iteration_bounds = array<i64: 2, 1>, scalar_prefetch = 0 : i64, scratch_operands = 0 : i64, tpu.core_type = #tpu.core_type<tc>, window_params = [{transform_indices = @transform_0, window_bounds = array<i64: 1, 8, 32>}, {pipeline_mode = #tpu.pipeline_mode<synchronous>, transform_indices = @transform_1, window_bounds = array<i64: 1, 8, 32>}, {pipeline_mode = #tpu.pipeline_mode<synchronous>, transform_indices = @transform_2, window_bounds = array<i64: 1, 8, 32>}, {transform_indices = @transform_3, window_bounds = array<i64: 1, 8, 32>}, {transform_indices = @transform_4, window_bounds = array<i64: 1, 8, 8>}]} {
    %c0 = arith.constant 0 : index
    %c0_0 = arith.constant 0 : index
    %c0_1 = arith.constant 0 : index
    %0 = vector.load %arg2[%c0, %c0_0, %c0_1] : memref<1x8x32xf32, #tpu.memory_space<vmem>>, vector<1x8x32xf32>
    %1 = vector.shape_cast %0 : vector<1x8x32xf32> to vector<8x32xf32>
    %c0_2 = arith.constant 0 : index
    %c0_3 = arith.constant 0 : index
    %c0_4 = arith.constant 0 : index
    %2 = vector.load %arg3[%c0_2, %c0_3, %c0_4] : memref<1x8x32xf32, #tpu.memory_space<vmem>>, vector<1x8x32xf32>
    %3 = vector.shape_cast %2 : vector<1x8x32xf32> to vector<8x32xf32>
    %c0_5 = arith.constant 0 : index
    %c0_6 = arith.constant 0 : index
    %c0_7 = arith.constant 0 : index
    %4 = vector.load %arg4[%c0_5, %c0_6, %c0_7] : memref<1x8x32xf32, #tpu.memory_space<vmem>>, vector<1x8x32xf32>
    %5 = vector.shape_cast %4 : vector<1x8x32xf32> to vector<8x32xf32>
    %cst = arith.constant dense<0.000000e+00> : vector<8x8xf32>
    %6 = tpu.matmul %1, %3, %cst {dimension_numbers = #tpu.dot_dimension_numbers<[1], [1], [0], [0], [0, 0, 1, 0], [], []>} : vector<8x32xf32>, vector<8x32xf32>, vector<8x8xf32> -> vector<8x8xf32>
    %cst_8 = arith.constant dense<0xFF800000> : vector<8xf32>
    %7 = vector.multi_reduction <maximumf>, %6, %cst_8 [1] : vector<8x8xf32> to vector<8xf32>
    %8 = vector.shape_cast %7 : vector<8xf32> to vector<8x1xf32>
    %9 = vector.broadcast %8 : vector<8x1xf32> to vector<8x8xf32>
    %10 = arith.subf %6, %9 : vector<8x8xf32>
    %11 = math.exp %10 : vector<8x8xf32>
    %cst_9 = arith.constant dense<0.000000e+00> : vector<8xf32>
    %12 = vector.multi_reduction <add>, %11, %cst_9 [1] : vector<8x8xf32> to vector<8xf32>
    %13 = vector.shape_cast %12 : vector<8xf32> to vector<8x1xf32>
    %14 = tpu.reciprocal %13 : vector<8x1xf32> -> vector<8x1xf32>
    %15 = vector.broadcast %14 : vector<8x1xf32> to vector<8x8xf32>
    %16 = arith.mulf %11, %15 : vector<8x8xf32>
    %c0_10 = arith.constant 0 : index
    %c0_11 = arith.constant 0 : index
    %c0_12 = arith.constant 0 : index
    %17 = vector.load %arg6[%c0_10, %c0_11, %c0_12] : memref<1x8x8xf32, #tpu.memory_space<vmem>>, vector<1x8x8xf32>
    %18 = vector.shape_cast %17 : vector<1x8x8xf32> to vector<8x8xf32>
    %19 = vector.shape_cast %16 : vector<8x8xf32> to vector<1x8x8xf32>
    tpu.vector_store %arg6[%c0_10, %c0_11, %c0_12], %19 {strides = array<i32>} : memref<1x8x8xf32, #tpu.memory_space<vmem>>, vector<1x8x8xf32>,
    %cst_13 = arith.constant dense<0.000000e+00> : vector<8x32xf32>
    %20 = tpu.matmul %16, %5, %cst_13 {dimension_numbers = #tpu.dot_dimension_numbers<[1], [0], [0], [1], [0, 0, 1, 1], [], []>} : vector<8x8xf32>, vector<8x32xf32>, vector<8x32xf32> -> vector<8x32xf32>
    %c0_14 = arith.constant 0 : index
    %c0_15 = arith.constant 0 : index
    %c0_16 = arith.constant 0 : index
    %21 = vector.load %arg5[%c0_14, %c0_15, %c0_16] : memref<1x8x32xf32, #tpu.memory_space<vmem>>, vector<1x8x32xf32>
    %22 = vector.shape_cast %21 : vector<1x8x32xf32> to vector<8x32xf32>
    %23 = vector.shape_cast %20 : vector<8x32xf32> to vector<1x8x32xf32>
    tpu.vector_store %arg5[%c0_14, %c0_15, %c0_16], %23 {strides = array<i32>} : memref<1x8x32xf32, #tpu.memory_space<vmem>>, vector<1x8x32xf32>,
    return
  }
  func.func @transform_0(%arg0: i32, %arg1: i32) -> (i32, i32, i32) {
    %c0_i32 = arith.constant 0 : i32
    %c0_i32_0 = arith.constant 0 : i32
    return %arg0, %arg1, %c0_i32 : i32, i32, i32
  }
  func.func @transform_1(%arg0: i32, %arg1: i32) -> (i32, i32, i32) {
    %c0_i32 = arith.constant 0 : i32
    %c0_i32_0 = arith.constant 0 : i32
    %c0_i32_1 = arith.constant 0 : i32
    return %arg0, %c0_i32, %c0_i32_0 : i32, i32, i32
  }
  func.func @transform_2(%arg0: i32, %arg1: i32) -> (i32, i32, i32) {
    %c0_i32 = arith.constant 0 : i32
    %c0_i32_0 = arith.constant 0 : i32
    %c0_i32_1 = arith.constant 0 : i32
    return %arg0, %c0_i32, %c0_i32_0 : i32, i32, i32
  }
  func.func @transform_3(%arg0: i32, %arg1: i32) -> (i32, i32, i32) {
    %c0_i32 = arith.constant 0 : i32
    %c0_i32_0 = arith.constant 0 : i32
    return %arg0, %arg1, %c0_i32 : i32, i32, i32
  }
  func.func @transform_4(%arg0: i32, %arg1: i32) -> (i32, i32, i32) {
    %c0_i32 = arith.constant 0 : i32
    %c0_i32_0 = arith.constant 0 : i32
    return %arg0, %arg1, %c0_i32 : i32, i32, i32
  }
}

module attributes {stable_mosaic.version = 11 : i64} {
  func.func @_attention_kernel(%arg0: i32, %arg1: i32, %arg2: memref<1x8x32xf32, #tpu.memory_space<vmem>>, %arg3: memref<1x8x32xf32, #tpu.memory_space<vmem>>, %arg4: memref<1x8x32xf32, #tpu.memory_space<vmem>>, %arg5: memref<1x8x32xf32, #tpu.memory_space<vmem>>, %arg6: memref<1x8x8xf32, #tpu.memory_space<vmem>>) attributes {dimension_semantics = [#tpu.dimension_semantics<parallel>, #tpu.dimension_semantics<parallel>], iteration_bounds = array<i64: 2, 1>, scalar_prefetch = 0 : i64, scratch_operands = 0 : i64, tpu.core_type = #tpu.core_type<tc>, window_params = [{transform_indices = @transform_0, window_bounds = array<i64: 1, 8, 32>}, {transform_indices = @transform_1, window_bounds = array<i64: 1, 8, 32>}, {transform_indices = @transform_2, window_bounds = array<i64: 1, 8, 32>}, {transform_indices = @transform_3, window_bounds = array<i64: 1, 8, 32>}, {transform_indices = @transform_4, window_bounds = array<i64: 1, 8, 8>}]} {
    %c0 = arith.constant 0 : index
    %c0_0 = arith.constant 0 : index
    %c0_1 = arith.constant 0 : index
    %0 = vector.load %arg2[%c0, %c0_0, %c0_1] : memref<1x8x32xf32, #tpu.memory_space<vmem>>, vector<1x8x32xf32>
    %1 = vector.shape_cast %0 : vector<1x8x32xf32> to vector<8x32xf32>
    %c0_2 = arith.constant 0 : index
    %c0_3 = arith.constant 0 : index
    %c0_4 = arith.constant 0 : index
    %2 = vector.load %arg3[%c0_2, %c0_3, %c0_4] : memref<1x8x32xf32, #tpu.memory_space<vmem>>, vector<1x8x32xf32>
    %3 = vector.shape_cast %2 : vector<1x8x32xf32> to vector<8x32xf32>
    %c0_5 = arith.constant 0 : index
    %c0_6 = arith.constant 0 : index
    %c0_7 = arith.constant 0 : index
    %4 = vector.load %arg4[%c0_5, %c0_6, %c0_7] : memref<1x8x32xf32, #tpu.memory_space<vmem>>, vector<1x8x32xf32>
    %5 = vector.shape_cast %4 : vector<1x8x32xf32> to vector<8x32xf32>
    %cst = arith.constant dense<0.000000e+00> : vector<8x8xf32>
    %6 = tpu.matmul %1, %3, %cst {dimension_numbers = #tpu.dot_dimension_numbers<[1], [1], [0], [0], [0, 0, 1, 0], [], []>} : vector<8x32xf32>, vector<8x32xf32>, vector<8x8xf32> -> vector<8x8xf32>
    %cst_8 = arith.constant dense<0xFF800000> : vector<8xf32>
    %7 = vector.multi_reduction <maximumf>, %6, %cst_8 [1] : vector<8x8xf32> to vector<8xf32>
    %8 = vector.shape_cast %7 : vector<8xf32> to vector<8x1xf32>
    %9 = vector.broadcast %8 : vector<8x1xf32> to vector<8x8xf32>
    %10 = arith.subf %6, %9 : vector<8x8xf32>
    %11 = math.exp %10 : vector<8x8xf32>
    %cst_9 = arith.constant dense<0.000000e+00> : vector<8xf32>
    %12 = vector.multi_reduction <add>, %11, %cst_9 [1] : vector<8x8xf32> to vector<8xf32>
    %13 = vector.shape_cast %12 : vector<8xf32> to vector<8x1xf32>
    %14 = tpu.reciprocal %13 : vector<8x1xf32> -> vector<8x1xf32>
    %15 = vector.broadcast %14 : vector<8x1xf32> to vector<8x8xf32>
    %16 = arith.mulf %11, %15 : vector<8x8xf32>
    %c0_10 = arith.constant 0 : index
    %c0_11 = arith.constant 0 : index
    %c0_12 = arith.constant 0 : index
    %17 = vector.load %arg6[%c0_10, %c0_11, %c0_12] : memref<1x8x8xf32, #tpu.memory_space<vmem>>, vector<1x8x8xf32>
    %18 = vector.shape_cast %17 : vector<1x8x8xf32> to vector<8x8xf32>
    %19 = vector.shape_cast %16 : vector<8x8xf32> to vector<1x8x8xf32>
    tpu.vector_store %arg6[%c0_10, %c0_11, %c0_12], %19 {strides = array<i32>} : memref<1x8x8xf32, #tpu.memory_space<vmem>>, vector<1x8x8xf32>,
    %cst_13 = arith.constant dense<0.000000e+00> : vector<8x32xf32>
    %20 = tpu.matmul %16, %5, %cst_13 {dimension_numbers = #tpu.dot_dimension_numbers<[1], [0], [0], [1], [0, 0, 1, 1], [], []>} : vector<8x8xf32>, vector<8x32xf32>, vector<8x32xf32> -> vector<8x32xf32>
    %c0_14 = arith.constant 0 : index
    %c0_15 = arith.constant 0 : index
    %c0_16 = arith.constant 0 : index
    %21 = vector.load %arg5[%c0_14, %c0_15, %c0_16] : memref<1x8x32xf32, #tpu.memory_space<vmem>>, vector<1x8x32xf32>
    %22 = vector.shape_cast %21 : vector<1x8x32xf32> to vector<8x32xf32>
    %23 = vector.shape_cast %20 : vector<8x32xf32> to vector<1x8x32xf32>
    tpu.vector_store %arg5[%c0_14, %c0_15, %c0_16], %23 {strides = array<i32>} : memref<1x8x32xf32, #tpu.memory_space<vmem>>, vector<1x8x32xf32>,
    return
  }
  func.func @transform_0(%arg0: i32, %arg1: i32) -> (i32, i32, i32) {
    %c0_i32 = arith.constant 0 : i32
    %c0_i32_0 = arith.constant 0 : i32
    return %arg0, %arg1, %c0_i32 : i32, i32, i32
  }
  func.func @transform_1(%arg0: i32, %arg1: i32) -> (i32, i32, i32) {
    %c0_i32 = arith.constant 0 : i32
    %c0_i32_0 = arith.constant 0 : i32
    %c0_i32_1 = arith.constant 0 : i32
    return %arg0, %c0_i32, %c0_i32_0 : i32, i32, i32
  }
  func.func @transform_2(%arg0: i32, %arg1: i32) -> (i32, i32, i32) {
    %c0_i32 = arith.constant 0 : i32
    %c0_i32_0 = arith.constant 0 : i32
    %c0_i32_1 = arith.constant 0 : i32
    return %arg0, %c0_i32, %c0_i32_0 : i32, i32, i32
  }
  func.func @transform_3(%arg0: i32, %arg1: i32) -> (i32, i32, i32) {
    %c0_i32 = arith.constant 0 : i32
    %c0_i32_0 = arith.constant 0 : i32
    return %arg0, %arg1, %c0_i32 : i32, i32, i32
  }
  func.func @transform_4(%arg0: i32, %arg1: i32) -> (i32, i32, i32) {
    %c0_i32 = arith.constant 0 : i32
    %c0_i32_0 = arith.constant 0 : i32
    return %arg0, %arg1, %c0_i32 : i32, i32, i32
  }
}

</mosaic_0001>

<llo_original>
// kernel: tpu_custom_call.1
$region0: #{tpu_custom_call.1}
  #allocation0 [shape = 'u32[]', space=smem, size = 0x4, offset = 0x4, fixed_abs, tag = 'smem constant byte address 0x4 - core index']
  #allocation1 [shape = 'u32[144,128]{1,0:T(1,128)}', space=vmem, size = 0x12000, scoped, tag = 'internal scratch']
  %s0 = inlined_call_operand.hbm [shape: f32[2,8,32], index: 0, kind: input, shape index: {}]
  %s1 = inlined_call_operand.hbm [shape: f32[2,8,32], index: 1, kind: input, shape index: {}]
  %s2 = inlined_call_operand.hbm [shape: f32[2,8,32], index: 2, kind: input, shape index: {}]
  %s3 = inlined_call_operand.hbm [shape: f32[2,8,32], index: 3, kind: output, shape index: {0}]
  %s4 = inlined_call_operand.hbm [shape: f32[2,8,8], index: 4, kind: output, shape index: {1}]
  %5 = xla_tuple %s3, %s4
  %s6 = sld [smem:[#allocation0]]
  $region65: #{tpu_custom_call.1} parent=0
    _
  %s8 = ssub.s32 1, %s6
  %s9 = scalar_select 0, %s8, %s6
  $region1: #{tpu_custom_call.1} parent=0
    #allocation2 [shape = 'u8[8192]{0}', space=vmem, size = 0x2000, scoped, tag = 'input window, operand 0']
    #allocation3 [shape = 's32[2]{0}', space=sflag, size = 0x8, scoped, tag = 'scoped memory for tpu_custom_call.1']
    #allocation4 [shape = 's32[2]{0}', space=sflag, size = 0x8, scoped, tag = 'scoped memory for tpu_custom_call.1']
    #allocation5 [shape = 'u8[4096]{0}', space=vmem, size = 0x1000, scoped, tag = 'input window, operand 1, single buffered']
    #allocation6 [shape = 's32[1]{0}', space=sflag, size = 0x4, scoped, tag = 'scoped memory for tpu_custom_call.1']
    #allocation7 [shape = 'u8[4096]{0}', space=vmem, size = 0x1000, scoped, tag = 'input window, operand 2, single buffered']
    #allocation8 [shape = 'u8[8192]{0}', space=vmem, size = 0x2000, scoped, tag = 'output window, operand 0']
    #allocation9 [shape = 'u8[8192]{0}', space=vmem, size = 0x2000, scoped, tag = 'output window, operand 1']
    #allocation10 [shape = 's32[2]{0}', space=sflag, size = 0x8, scoped, tag = 'scoped memory for tpu_custom_call.1']
    %10 = vsyncpa [#allocation3], 0
    %s11 = scalar_lea.sflag [#allocation3], 1
    %12 = vsyncpa %s11, 0
    %13 = vsyncpa [#allocation6], 0
    %14 = vsyncpa [#allocation4], 0
    %s15 = scalar_lea.sflag [#allocation4], 1
    %16 = vsyncpa %s15, 0
    %17 = vsyncpa [#allocation10], 0
    %s18 = scalar_lea.sflag [#allocation10], 1
    %19 = vsyncpa %s18, 0
    loop: start=0, step=1, limit=4
    $region2: #{tpu_custom_call.1} parent=1 // loop_pre_header
      _
    $region3: #{tpu_custom_call.1} parent=1 // loop_header
      %s21 = sphi 0, %s25
      %p22 = scmp.ge.s32.totalorder %s21, 4
      %s28 = sphi 0, %s40
      %s29 = sphi 0, %s36
      %s30 = sphi 0, %s28
      %s31 = sphi 0, %s29
      %s32 = sphi 0, %s30
      %s33 = sphi 0, %s31
      %s45 = sphi 0, %s47
      %s48 = sphi 0, %s45
      %s49 = sphi 0, %s48
      %s65 = sphi 0, %s49
      %s71 = sphi 0, %s73
      %s74 = sphi 0, %s71
      %s75 = sphi 0, %s74
      %s91 = sphi 0, %s75
      %s97 = sphi 0, %s99
      %s100 = sphi 0, %s97
      %s101 = sphi 0, %s100
      %s117 = sphi 0, %s101
      %s125 = sphi 0, %s127
      %s128 = sphi 0, %s125
      %s129 = sphi 0, %s128
      %s145 = sphi 0, %s129
      %s153 = sphi 0, %s155
      %s156 = sphi 0, %s153
      %s157 = sphi 0, %s156
      %s173 = sphi 0, %s157
    $region4: #{tpu_custom_call.1} parent=1 // loop_header_branch
      %24 = sbr.rel (%p22) target = $region8
    $region5: #{tpu_custom_call.1} parent=1 // loop_body
      %s26 = ssub.s32 %s21, 1
      %s27 = ssub.s32 %s21, 2
      %s34 = sadd.s32 1, %s29
      %p35 = scmp.ge.s32.totalorder %s34, 1
      %s36 = scalar_select %p35, 0, %s34
      %s37 = sadd.s32 1, %s28
      %s38 = scalar_select %p35, %s37, %s28
      %p39 = scmp.ge.s32.totalorder %s38, 2
      %s40 = scalar_select %p39, 0, %s38
      %s41 = ssub.s32 %s28, %s40
      %s42 = ssub.s32 %s29, %s36
      %s43 = sor.u32 %s41, %s42
      %p44 = scmp.eq.s32.totalorder %s43, 0
      %s46 = sadd.s32 %s45, 1
      %s47 = scalar_select %p44, %s45, %s46
      %p50 = pneg %p44
      %p51 = scmp.eq.s32.totalorder %s21, 1
      %p52 = por %p50, %p51
      %p53 = scmp.ne.s32.totalorder %s45, %s48
      %p54 = scmp.eq.s32.totalorder %s21, 0
      %p55 = por %p53, %p54
      %p56 = scmp.ne.s32.totalorder %s45, %s48
      %p57 = scmp.eq.s32.totalorder %s26, 1
      %p58 = por %p56, %p57
      %p59 = scmp.ne.s32.totalorder %s48, %s49
      %p60 = scmp.eq.s32.totalorder %s26, 0
      %p61 = por %p59, %p60
      %p62 = scmp.ne.s32.totalorder %s48, %s49
      %p63 = scmp.eq.s32.totalorder %s27, 1
      %p64 = por %p62, %p63
      %p66 = scmp.ne.s32.totalorder %s49, %s65
      %p67 = scmp.eq.s32.totalorder %s27, 0
      %p68 = por %p66, %p67
      %s69 = ssub.s32 %s28, %s40
      %p70 = scmp.eq.s32.totalorder %s69, 0
      %s72 = sadd.s32 %s71, 1
      %s73 = scalar_select %p70, %s71, %s72
      %p76 = pneg %p70
      %p77 = scmp.eq.s32.totalorder %s21, 1
      %p78 = por %p76, %p77
      %p79 = scmp.ne.s32.totalorder %s71, %s74
      %p80 = scmp.eq.s32.totalorder %s21, 0
      %p81 = por %p79, %p80
      %p82 = scmp.ne.s32.totalorder %s71, %s74
      %p83 = scmp.eq.s32.totalorder %s26, 1
      %p84 = por %p82, %p83
      %p85 = scmp.ne.s32.totalorder %s74, %s75
      %p86 = scmp.eq.s32.totalorder %s26, 0
      %p87 = por %p85, %p86
      %p88 = scmp.ne.s32.totalorder %s74, %s75
      %p89 = scmp.eq.s32.totalorder %s27, 1
      %p90 = por %p88, %p89
      %p92 = scmp.ne.s32.totalorder %s75, %s91
      %p93 = scmp.eq.s32.totalorder %s27, 0
      %p94 = por %p92, %p93
      %s95 = ssub.s32 %s28, %s40
      %p96 = scmp.eq.s32.totalorder %s95, 0
      %s98 = sadd.s32 %s97, 1
      %s99 = scalar_select %p96, %s97, %s98
      %p102 = pneg %p96
      %p103 = scmp.eq.s32.totalorder %s21, 1
      %p104 = por %p102, %p103
      %p105 = scmp.ne.s32.totalorder %s97, %s100
      %p106 = scmp.eq.s32.totalorder %s21, 0
      %p107 = por %p105, %p106
      %p108 = scmp.ne.s32.totalorder %s97, %s100
      %p109 = scmp.eq.s32.totalorder %s26, 1
      %p110 = por %p108, %p109
      %p111 = scmp.ne.s32.totalorder %s100, %s101
      %p112 = scmp.eq.s32.totalorder %s26, 0
      %p113 = por %p111, %p112
      %p114 = scmp.ne.s32.totalorder %s100, %s101
      %p115 = scmp.eq.s32.totalorder %s27, 1
      %p116 = por %p114, %p115
      %p118 = scmp.ne.s32.totalorder %s101, %s117
      %p119 = scmp.eq.s32.totalorder %s27, 0
      %p120 = por %p118, %p119
      %s121 = ssub.s32 %s28, %s40
      %s122 = ssub.s32 %s29, %s36
      %s123 = sor.u32 %s121, %s122
      %p124 = scmp.eq.s32.totalorder %s123, 0
      %s126 = sadd.s32 %s125, 1
      %s127 = scalar_select %p124, %s125, %s126
      %p130 = pneg %p124
      %p131 = scmp.eq.s32.totalorder %s21, 1
      %p132 = por %p130, %p131
      %p133 = scmp.ne.s32.totalorder %s125, %s128
      %p134 = scmp.eq.s32.totalorder %s21, 0
      %p135 = por %p133, %p134
      %p136 = scmp.ne.s32.totalorder %s125, %s128
      %p137 = scmp.eq.s32.totalorder %s26, 1
      %p138 = por %p136, %p137
      %p139 = scmp.ne.s32.totalorder %s128, %s129
      %p140 = scmp.eq.s32.totalorder %s26, 0
      %p141 = por %p139, %p140
      %p142 = scmp.ne.s32.totalorder %s128, %s129
      %p143 = scmp.eq.s32.totalorder %s27, 1
      %p144 = por %p142, %p143
      %p146 = scmp.ne.s32.totalorder %s129, %s145
      %p147 = scmp.eq.s32.totalorder %s27, 0
      %p148 = por %p146, %p147
      %s149 = ssub.s32 %s28, %s40
      %s150 = ssub.s32 %s29, %s36
      %s151 = sor.u32 %s149, %s150
      %p152 = scmp.eq.s32.totalorder %s151, 0
      %s154 = sadd.s32 %s153, 1
      %s155 = scalar_select %p152, %s153, %s154
      %p158 = pneg %p152
      %p159 = scmp.eq.s32.totalorder %s21, 1
      %p160 = por %p158, %p159
      %p161 = scmp.ne.s32.totalorder %s153, %s156
      %p162 = scmp.eq.s32.totalorder %s21, 0
      %p163 = por %p161, %p162
      %p164 = scmp.ne.s32.totalorder %s153, %s156
      %p165 = scmp.eq.s32.totalorder %s26, 1
      %p166 = por %p164, %p165
      %p167 = scmp.ne.s32.totalorder %s156, %s157
      %p168 = scmp.eq.s32.totalorder %s26, 0
      %p169 = por %p167, %p168
      %p170 = scmp.ne.s32.totalorder %s156, %s157
      %p171 = scmp.eq.s32.totalorder %s27, 1
      %p172 = por %p170, %p171
      %p174 = scmp.ne.s32.totalorder %s157, %s173
      %p175 = scmp.eq.s32.totalorder %s27, 0
      %p176 = por %p174, %p175
      %p177 = scmp.le.s32.totalorder 1, %s21
      %p178 = scmp.lt.s32.totalorder %s21, 3
      %p179 = pnand %p177, %p178
      %p180 = pneg %p179
      // Predicated region
      $region9: #{tpu_custom_call.1} parent=5 // pred_check
        _
      $region10: #{tpu_custom_call.1} parent=5 // pred_check_branch
        %182 = sbr.rel (%p179) target = $region12
      $region11: #{tpu_custom_call.1} parent=5 // pred_region
        %s183 = ssub.s32 %s21, 1
        // Predicated region
        $region13: #{tpu_custom_call.1} parent=11 // pred_check
          %p184 = pneg %p87
        $region14: #{tpu_custom_call.1} parent=11 // pred_check_branch
          %186 = sbr.rel (%p184) target = $region16
        $region15: #{tpu_custom_call.1} parent=11 // pred_region
          %s188 = ssub.s32 128, 128
          %189 = vsyncadd [#allocation6], %s188
          %s190 = smul.addr %s30, 128
          %s191 = scalar_lea.hbm %s1, %s190
          %s193 = sshll.u32 [#allocation5], 4
          %s194 = int_to_ptr.vmem [resolvable:$true] %s193
          %196 = dma.hbm_to_vmem [thread:$0]  %s191, 128, %s194, [#allocation6]
        $region16: #{tpu_custom_call.1} parent=11 // pred_fallthru
          _
        // Predicated region
        $region17: #{tpu_custom_call.1} parent=11 // pred_check
          %p197 = pneg %p113
        $region18: #{tpu_custom_call.1} parent=11 // pred_check_branch
          %199 = sbr.rel (%p197) target = $region20
        $region19: #{tpu_custom_call.1} parent=11 // pred_region
          %s201 = ssub.s32 128, 128
          %202 = vsyncadd [#allocation6], %s201
          %s203 = smul.addr %s30, 128
          %s204 = scalar_lea.hbm %s2, %s203
          %s206 = sshll.u32 [#allocation7], 4
          %s207 = int_to_ptr.vmem [resolvable:$true] %s206
          %209 = dma.hbm_to_vmem [thread:$0]  %s204, 128, %s207, [#allocation6]
        $region20: #{tpu_custom_call.1} parent=11 // pred_fallthru
          _
      $region12: #{tpu_custom_call.1} parent=5 // pred_fallthru
        _
      %p210 = scmp.lt.s32.totalorder %s21, 2
      // Predicated region
      $region21: #{tpu_custom_call.1} parent=5 // pred_check
        %p211 = pneg %p210
      $region22: #{tpu_custom_call.1} parent=5 // pred_check_branch
        %213 = sbr.rel (%p211) target = $region24
      $region23: #{tpu_custom_call.1} parent=5 // pred_region
        // Predicated region
        $region25: #{tpu_custom_call.1} parent=23 // pred_check
          %p214 = pneg %p55
        $region26: #{tpu_custom_call.1} parent=23 // pred_check_branch
          %216 = sbr.rel (%p214) target = $region28
        $region27: #{tpu_custom_call.1} parent=23 // pred_region
          %s217 = sand.u32 %s45, 1
          %s218 = scalar_lea.sflag [#allocation3], %s217
          %s219 = sand.u32 %s45, 1
          %s220 = smul.addr %s219, 8
          %s221 = scalar_lea.vmem [#allocation2], %s220
          %s223 = ssub.s32 128, 128
          %224 = vsyncadd %s218, %s223
          %s225 = sadd.s32 %s29, %s28
          %s226 = smul.addr %s225, 128
          %s227 = scalar_lea.hbm %s0, %s226
          %s229 = sshll.u32 %s221, 4
          %s230 = int_to_ptr.vmem [resolvable:$true] %s229
          %232 = dma.hbm_to_vmem [thread:$0]  %s227, 128, %s230, %s218
        $region28: #{tpu_custom_call.1} parent=23 // pred_fallthru
          _
      $region24: #{tpu_custom_call.1} parent=5 // pred_fallthru
        _
      %p233 = scmp.le.s32.totalorder 1, %s21
      %p234 = scmp.lt.s32.totalorder %s21, 3
      %p235 = pnand %p233, %p234
      %p236 = pneg %p235
      // Predicated region
      $region29: #{tpu_custom_call.1} parent=5 // pred_check
        _
      $region30: #{tpu_custom_call.1} parent=5 // pred_check_branch
        %238 = sbr.rel (%p235) target = $region32
      $region31: #{tpu_custom_call.1} parent=5 // pred_region
        %s239 = ssub.s32 %s21, 1
        %s240 = sand.u32 %s48, 1
        %s241 = scalar_lea.sflag [#allocation3], %s240
        %s242 = sand.u32 %s48, 1
        %s243 = smul.addr %s242, 8
        %s244 = scalar_lea.vmem [#allocation2], %s243
        // Predicated region
        $region33: #{tpu_custom_call.1} parent=31 // pred_check
          %p245 = pneg %p61
        $region34: #{tpu_custom_call.1} parent=31 // pred_check_branch
          %247 = sbr.rel (%p245) target = $region36
        $region35: #{tpu_custom_call.1} parent=31 // pred_region
          %248 = dma.done %s241, 128
        $region36: #{tpu_custom_call.1} parent=31 // pred_fallthru
          _
        // Predicated region
        $region37: #{tpu_custom_call.1} parent=31 // pred_check
          %p249 = pneg %p87
        $region38: #{tpu_custom_call.1} parent=31 // pred_check_branch
          %251 = sbr.rel (%p249) target = $region40
        $region39: #{tpu_custom_call.1} parent=31 // pred_region
          %252 = dma.done [#allocation6], 128
        $region40: #{tpu_custom_call.1} parent=31 // pred_fallthru
          _
        // Predicated region
        $region41: #{tpu_custom_call.1} parent=31 // pred_check
          %p253 = pneg %p113
        $region42: #{tpu_custom_call.1} parent=31 // pred_check_branch
          %255 = sbr.rel (%p253) target = $region44
        $region43: #{tpu_custom_call.1} parent=31 // pred_region
          %256 = dma.done [#allocation6], 128
        $region44: #{tpu_custom_call.1} parent=31 // pred_fallthru
          _
        %s257 = sand.u32 %s48, 1
        %s258 = scalar_lea.sflag [#allocation3], %s257
        %s259 = sand.u32 %s48, 1
        %s260 = smul.addr %s259, 8
        %s261 = scalar_lea.vmem [#allocation2], %s260
        %p262 = pneg %p61
        %p263 = pneg %p58
        %p264 = pneg %p87
        %p265 = pneg %p84
        %p266 = pneg %p113
        %p267 = pneg %p110
        %p268 = pneg %p141
        %p269 = pneg %p138
        %s270 = sand.u32 %s128, 1
        %s271 = scalar_lea.sflag [#allocation4], %s270
        %s272 = sand.u32 %s128, 1
        %s273 = smul.addr %s272, 8
        %s274 = scalar_lea.vmem [#allocation8], %s273
        %p275 = pneg %p169
        %p276 = pneg %p166
        %s277 = sand.u32 %s156, 1
        %s278 = scalar_lea.sflag [#allocation10], %s277
        %s279 = sand.u32 %s156, 1
        %s280 = smul.addr %s279, 8
        %s281 = scalar_lea.vmem [#allocation9], %s280
        %v282 = vld [vmem:[%s244] sm:$0xff]
        %v283 = vld [vmem:[#allocation5] sm:$0xff]
        %v284 = vld [vmem:[#allocation7] sm:$0xff]
        %vm285 = vcmask 261120
        %v287 = vsel %vm285, %v282, 0
        %v290 = vsel %vm285, %v283, 0
        %292 = vmatprep.subr.mxu0 0.0
        %293 = vmatpush1.xpose.msra.mxu0 0.0
        %294 = vmatprep.subr.mxu0 0.0
        %295 = vmatpush1.xpose.msra.mxu0 0.0
        %296 = vmatprep.subr.mxu0 0.0
        %297 = vmatpush1.xpose.msra.mxu0 0.0
        %298 = vmatprep.subr.mxu0 0.0
        %299 = vmatpush1.xpose.msra.mxu0 0.0
        %300 = vmatprep.subr.mxu0 0.0
        %301 = vmatpush1.xpose.msra.mxu0 0.0
        %302 = vmatprep.subr.mxu0 0.0
        %303 = vmatpush1.xpose.msra.mxu0 0.0
        %304 = vmatprep.subr.mxu0 0.0
        %305 = vmatpush1.xpose.msra.mxu0 0.0
        %306 = vmatprep.subr.mxu0 0.0
        %307 = vmatpush1.xpose.msra.mxu0 0.0
        %308 = vmatprep.subr.mxu0 0.0
        %309 = vmatpush1.xpose.msra.mxu0 0.0
        %310 = vmatprep.subr.mxu0 0.0
        %311 = vmatpush1.xpose.msra.mxu0 0.0
        %312 = vmatprep.subr.mxu0 0.0
        %313 = vmatpush1.xpose.msra.mxu0 0.0
        %314 = vmatprep.subr.mxu0 0.0
        %315 = vmatpush1.xpose.msra.mxu0 0.0
        %316 = vmatprep.subr.mxu0 0.0
        %317 = vmatpush1.xpose.msra.mxu0 0.0
        %318 = vmatprep.subr.mxu0 0.0
        %319 = vmatpush1.xpose.msra.mxu0 0.0
        %320 = vmatprep.subr.mxu0 0.0
        %321 = vmatpush1.xpose.msra.mxu0 0.0
        %322 = vmatprep.subr.mxu0 0.0
        %323 = vmatpush1.xpose.msra.mxu0 %v290
        %324 = vmatprep.subr.mxu0 0.0
        %325 = vmatpush2.xpose.msra.mxu0 0.0
        %326 = vmatprep.subr.mxu0 0.0
        %327 = vmatpush2.xpose.msra.mxu0 0.0
        %328 = vmatprep.subr.mxu0 0.0
        %329 = vmatpush2.xpose.msra.mxu0 0.0
        %330 = vmatprep.subr.mxu0 0.0
        %331 = vmatpush2.xpose.msra.mxu0 0.0
        %332 = vmatprep.subr.mxu0 0.0
        %333 = vmatpush2.xpose.msra.mxu0 0.0
        %334 = vmatprep.subr.mxu0 0.0
        %335 = vmatpush2.xpose.msra.mxu0 0.0
        %336 = vmatprep.subr.mxu0 0.0
        %337 = vmatpush2.xpose.msra.mxu0 0.0
        %338 = vmatprep.subr.mxu0 0.0
        %339 = vmatpush2.xpose.msra.mxu0 0.0
        %340 = vmatprep.subr.mxu0 0.0
        %341 = vmatpush2.xpose.msra.mxu0 0.0
        %342 = vmatprep.subr.mxu0 0.0
        %343 = vmatpush2.xpose.msra.mxu0 0.0
        %344 = vmatprep.subr.mxu0 0.0
        %345 = vmatpush2.xpose.msra.mxu0 0.0
        %346 = vmatprep.subr.mxu0 0.0
        %347 = vmatpush2.xpose.msra.mxu0 0.0
        %348 = vmatprep.subr.mxu0 0.0
        %349 = vmatpush2.xpose.msra.mxu0 0.0
        %350 = vmatprep.subr.mxu0 0.0
        %351 = vmatpush2.xpose.msra.mxu0 0.0
        %352 = vmatprep.subr.mxu0 0.0
        %353 = vmatpush2.xpose.msra.mxu0 0.0
        %354 = vmatprep.subr.mxu0 0.0
        %355 = vmatpush2.xpose.msra.mxu0 0.0
        %356 = vmatprep.mubr.f32.mxu0 0.0
        %357 = vmatmul.mubr.f32.gmra.mxu0 %v287
        %v358 = vpop.f32.mrf.mxu0
        %v359 = vadd.f32 0.0, %v358
        %v360 = vpop.f32.mrf.mxu0
        %361 = vdwg.mxu0
        %vm362 = vcmask 64512
        %v363 = vsel %vm362, %v359, -inf
        %364 = vmax.xlane.f32.xlu0 %v363
        %v365 = vpop.xlane.xlu0 %364
        %v366 = vsub.f32 %v359, %v365
        %v367 = vmul.f32 %v366, 1.442695
        %v368 = vpow.pop %v367
        %v369 = vsel %vm362, %v368, 0.0
        %370 = vadd.xlane.f32.xlu0 %v369
        %v371 = vpop.xlane.xlu0 %370
        %v372 = vrcp.pop %v371
        %v373 = vmul.f32 %v368, %v372
        %374 = vst.msk [vmem:[%s281] sm:$0xff] %vm362, %v373
        %v376 = vsel %vm362, %v373, 0
        %378 = vmatprep.subr.mxu0 0.0
        %379 = vmatpush1.msra.mxu0 0.0
        %380 = vmatprep.subr.mxu0 0.0
        %381 = vmatpush1.msra.mxu0 0.0
        %382 = vmatprep.subr.mxu0 0.0
        %383 = vmatpush1.msra.mxu0 0.0
        %384 = vmatprep.subr.mxu0 0.0
        %385 = vmatpush1.msra.mxu0 0.0
        %386 = vmatprep.subr.mxu0 0.0
        %387 = vmatpush1.msra.mxu0 0.0
        %388 = vmatprep.subr.mxu0 0.0
        %389 = vmatpush1.msra.mxu0 0.0
        %390 = vmatprep.subr.mxu0 0.0
        %391 = vmatpush1.msra.mxu0 0.0
        %392 = vmatprep.subr.mxu0 0.0
        %393 = vmatpush1.msra.mxu0 0.0
        %394 = vmatprep.subr.mxu0 0.0
        %395 = vmatpush1.msra.mxu0 0.0
        %396 = vmatprep.subr.mxu0 0.0
        %397 = vmatpush1.msra.mxu0 0.0
        %398 = vmatprep.subr.mxu0 0.0
        %399 = vmatpush1.msra.mxu0 0.0
        %400 = vmatprep.subr.mxu0 0.0
        %401 = vmatpush1.msra.mxu0 0.0
        %402 = vmatprep.subr.mxu0 0.0
        %403 = vmatpush1.msra.mxu0 0.0
        %404 = vmatprep.subr.mxu0 0.0
        %405 = vmatpush1.msra.mxu0 0.0
        %406 = vmatprep.subr.mxu0 0.0
        %407 = vmatpush1.msra.mxu0 0.0
        %408 = vmatprep.subr.mxu0 0.0
        %409 = vmatpush1.msra.mxu0 %v284
        %410 = vmatprep.subr.mxu0 0.0
        %411 = vmatpush2.msra.mxu0 0.0
        %412 = vmatprep.subr.mxu0 0.0
        %413 = vmatpush2.msra.mxu0 0.0
        %414 = vmatprep.subr.mxu0 0.0
        %415 = vmatpush2.msra.mxu0 0.0
        %416 = vmatprep.subr.mxu0 0.0
        %417 = vmatpush2.msra.mxu0 0.0
        %418 = vmatprep.subr.mxu0 0.0
        %419 = vmatpush2.msra.mxu0 0.0
        %420 = vmatprep.subr.mxu0 0.0
        %421 = vmatpush2.msra.mxu0 0.0
        %422 = vmatprep.subr.mxu0 0.0
        %423 = vmatpush2.msra.mxu0 0.0
        %424 = vmatprep.subr.mxu0 0.0
        %425 = vmatpush2.msra.mxu0 0.0
        %426 = vmatprep.subr.mxu0 0.0
        %427 = vmatpush2.msra.mxu0 0.0
        %428 = vmatprep.subr.mxu0 0.0
        %429 = vmatpush2.msra.mxu0 0.0
        %430 = vmatprep.subr.mxu0 0.0
        %431 = vmatpush2.msra.mxu0 0.0
        %432 = vmatprep.subr.mxu0 0.0
        %433 = vmatpush2.msra.mxu0 0.0
        %434 = vmatprep.subr.mxu0 0.0
        %435 = vmatpush2.msra.mxu0 0.0
        %436 = vmatprep.subr.mxu0 0.0
        %437 = vmatpush2.msra.mxu0 0.0
        %438 = vmatprep.subr.mxu0 0.0
        %439 = vmatpush2.msra.mxu0 0.0
        %440 = vmatprep.subr.mxu0 0.0
        %441 = vmatpush2.msra.mxu0 0.0
        %442 = vmatprep.mubr.f32.mxu0 0.0
        %443 = vmatmul.mubr.f32.gmra.mxu0 %v376
        %v444 = vpop.f32.mrf.mxu0
        %v445 = vadd.f32 0.0, %v444
        %v446 = vpop.f32.mrf.mxu0
        %447 = vdwg.mxu0
        %448 = vst.msk [vmem:[%s274] sm:$0xff] %vm285, %v445
        %s449 = sand.u32 %s128, 1
        %s450 = scalar_lea.sflag [#allocation4], %s449
        %s451 = sand.u32 %s128, 1
        %s452 = smul.addr %s451, 8
        %s453 = scalar_lea.vmem [#allocation8], %s452
        %s454 = sand.u32 %s156, 1
        %s455 = scalar_lea.sflag [#allocation10], %s454
        %s456 = sand.u32 %s156, 1
        %s457 = smul.addr %s456, 8
        %s458 = scalar_lea.vmem [#allocation9], %s457
        // Predicated region
        $region45: #{tpu_custom_call.1} parent=31 // pred_check
          %p459 = pneg %p138
        $region46: #{tpu_custom_call.1} parent=31 // pred_check_branch
          %461 = sbr.rel (%p459) target = $region48
        $region47: #{tpu_custom_call.1} parent=31 // pred_region
          %s463 = ssub.s32 128, 128
          %464 = vsyncadd %s450, %s463
          %s465 = sadd.s32 %s31, %s30
          %s466 = smul.addr %s465, 128
          %s467 = scalar_lea.hbm %s3, %s466
          %s469 = sshll.u32 %s453, 4
          %s470 = int_to_ptr.vmem [resolvable:$true] %s469
          %472 = dma.vmem_to_hbm [thread:$0]  %s470, 128, %s467, %s450
        $region48: #{tpu_custom_call.1} parent=31 // pred_fallthru
          _
        // Predicated region
        $region49: #{tpu_custom_call.1} parent=31 // pred_check
          %p473 = pneg %p166
        $region50: #{tpu_custom_call.1} parent=31 // pred_check_branch
          %475 = sbr.rel (%p473) target = $region52
        $region51: #{tpu_custom_call.1} parent=31 // pred_region
          %s477 = ssub.s32 128, 128
          %478 = vsyncadd %s455, %s477
          %s479 = sadd.s32 %s31, %s30
          %s480 = smul.addr %s479, 128
          %s481 = scalar_lea.hbm %s4, %s480
          %s483 = sshll.u32 %s458, 4
          %s484 = int_to_ptr.vmem [resolvable:$true] %s483
          %486 = dma.vmem_to_hbm [thread:$0]  %s484, 128, %s481, %s455
        $region52: #{tpu_custom_call.1} parent=31 // pred_fallthru
          _
      $region32: #{tpu_custom_call.1} parent=5 // pred_fallthru
        _
      %p487 = scmp.le.s32.totalorder 2, %s21
      // Predicated region
      $region53: #{tpu_custom_call.1} parent=5 // pred_check
        %p488 = pneg %p487
      $region54: #{tpu_custom_call.1} parent=5 // pred_check_branch
        %490 = sbr.rel (%p488) target = $region56
      $region55: #{tpu_custom_call.1} parent=5 // pred_region
        %s491 = ssub.s32 %s21, 2
        // Predicated region
        $region57: #{tpu_custom_call.1} parent=55 // pred_check
          %p492 = pneg %p144
        $region58: #{tpu_custom_call.1} parent=55 // pred_check_branch
          %494 = sbr.rel (%p492) target = $region60
        $region59: #{tpu_custom_call.1} parent=55 // pred_region
          %s495 = sand.u32 %s129, 1
          %s496 = scalar_lea.sflag [#allocation4], %s495
          %s497 = sand.u32 %s129, 1
          %s498 = smul.addr %s497, 8
          %s499 = scalar_lea.vmem [#allocation8], %s498
          %500 = dma.done %s496, 128
        $region60: #{tpu_custom_call.1} parent=55 // pred_fallthru
          _
        // Predicated region
        $region61: #{tpu_custom_call.1} parent=55 // pred_check
          %p501 = pneg %p172
        $region62: #{tpu_custom_call.1} parent=55 // pred_check_branch
          %503 = sbr.rel (%p501) target = $region64
        $region63: #{tpu_custom_call.1} parent=55 // pred_region
          %s504 = sand.u32 %s157, 1
          %s505 = scalar_lea.sflag [#allocation10], %s504
          %s506 = sand.u32 %s157, 1
          %s507 = smul.addr %s506, 8
          %s508 = scalar_lea.vmem [#allocation9], %s507
          %509 = dma.done %s505, 128
        $region64: #{tpu_custom_call.1} parent=55 // pred_fallthru
          _
      $region56: #{tpu_custom_call.1} parent=5 // pred_fallthru
        _
    $region6: #{tpu_custom_call.1} parent=1 // loop_footer
      %s25 = sadd.s32 1, %s21
    $region7: #{tpu_custom_call.1} parent=1 // loop_footer_branch
      %20 = sbr.rel target = $region3
    $region8: #{tpu_custom_call.1} parent=1 // loop_exit
      _
    %510 = vsyncpa [#allocation3], 1
    %s511 = scalar_lea.sflag [#allocation3], 1
    %512 = vsyncpa %s511, 1
    %513 = vsyncpa [#allocation6], 1
    %514 = vsyncpa [#allocation4], 1
    %s515 = scalar_lea.sflag [#allocation4], 1
    %516 = vsyncpa %s515, 1
    %517 = vsyncpa [#allocation10], 1
    %s518 = scalar_lea.sflag [#allocation10], 1
    %519 = vsyncpa %s518, 1

// kernel: tpu_custom_call.1
$region0: #{tpu_custom_call.1}
  #allocation0 [shape = 'u32[]', space=smem, size = 0x4, offset = 0x4, fixed_abs, tag = 'smem constant byte address 0x4 - core index']
  #allocation1 [shape = 'u32[144,128]{1,0:T(1,128)}', space=vmem, size = 0x12000, scoped, tag = 'internal scratch']
  %s0 = inlined_call_operand.hbm [shape: f32[2,8,32], index: 0, kind: input, shape index: {}]
  %s1 = inlined_call_operand.hbm [shape: f32[2,8,32], index: 1, kind: input, shape index: {}]
  %s2 = inlined_call_operand.hbm [shape: f32[2,8,32], index: 2, kind: input, shape index: {}]
  %s3 = inlined_call_operand.hbm [shape: f32[2,8,32], index: 3, kind: output, shape index: {0}]
  %s4 = inlined_call_operand.hbm [shape: f32[2,8,8], index: 4, kind: output, shape index: {1}]
  %5 = xla_tuple %s3, %s4
  %s6 = sld [smem:[#allocation0]]
  $region65: #{tpu_custom_call.1} parent=0
    _
  %s8 = ssub.s32 1, %s6
  %s9 = scalar_select 0, %s8, %s6
  $region1: #{tpu_custom_call.1} parent=0
    #allocation2 [shape = 'u8[8192]{0}', space=vmem, size = 0x2000, scoped, tag = 'input window, operand 0']
    #allocation3 [shape = 's32[2]{0}', space=sflag, size = 0x8, scoped, tag = 'scoped memory for tpu_custom_call.1']
    #allocation4 [shape = 's32[2]{0}', space=sflag, size = 0x8, scoped, tag = 'scoped memory for tpu_custom_call.1']
    #allocation5 [shape = 'u8[8192]{0}', space=vmem, size = 0x2000, scoped, tag = 'input window, operand 1']
    #allocation6 [shape = 's32[2]{0}', space=sflag, size = 0x8, scoped, tag = 'scoped memory for tpu_custom_call.1']
    #allocation7 [shape = 'u8[8192]{0}', space=vmem, size = 0x2000, scoped, tag = 'input window, operand 2']
    #allocation8 [shape = 'u8[8192]{0}', space=vmem, size = 0x2000, scoped, tag = 'output window, operand 0']
    #allocation9 [shape = 'u8[8192]{0}', space=vmem, size = 0x2000, scoped, tag = 'output window, operand 1']
    #allocation10 [shape = 's32[2]{0}', space=sflag, size = 0x8, scoped, tag = 'scoped memory for tpu_custom_call.1']
    %10 = vsyncpa [#allocation3], 0
    %s11 = scalar_lea.sflag [#allocation3], 1
    %12 = vsyncpa %s11, 0
    %13 = vsyncpa [#allocation6], 0
    %s14 = scalar_lea.sflag [#allocation6], 1
    %15 = vsyncpa %s14, 0
    %16 = vsyncpa [#allocation4], 0
    %s17 = scalar_lea.sflag [#allocation4], 1
    %18 = vsyncpa %s17, 0
    %19 = vsyncpa [#allocation10], 0
    %s20 = scalar_lea.sflag [#allocation10], 1
    %21 = vsyncpa %s20, 0
    loop: start=0, step=1, limit=4
    $region2: #{tpu_custom_call.1} parent=1 // loop_pre_header
      _
    $region3: #{tpu_custom_call.1} parent=1 // loop_header
      %s23 = sphi 0, %s27
      %p24 = scmp.ge.s32.totalorder %s23, 4
      %s30 = sphi 0, %s42
      %s31 = sphi 0, %s38
      %s32 = sphi 0, %s30
      %s33 = sphi 0, %s31
      %s34 = sphi 0, %s32
      %s35 = sphi 0, %s33
      %s47 = sphi 0, %s49
      %s50 = sphi 0, %s47
      %s51 = sphi 0, %s50
      %s67 = sphi 0, %s51
      %s73 = sphi 0, %s75
      %s76 = sphi 0, %s73
      %s77 = sphi 0, %s76
      %s93 = sphi 0, %s77
      %s99 = sphi 0, %s101
      %s102 = sphi 0, %s99
      %s103 = sphi 0, %s102
      %s119 = sphi 0, %s103
      %s127 = sphi 0, %s129
      %s130 = sphi 0, %s127
      %s131 = sphi 0, %s130
      %s147 = sphi 0, %s131
      %s155 = sphi 0, %s157
      %s158 = sphi 0, %s155
      %s159 = sphi 0, %s158
      %s175 = sphi 0, %s159
    $region4: #{tpu_custom_call.1} parent=1 // loop_header_branch
      %26 = sbr.rel (%p24) target = $region8
    $region5: #{tpu_custom_call.1} parent=1 // loop_body
      %s28 = ssub.s32 %s23, 1
      %s29 = ssub.s32 %s23, 2
      %s36 = sadd.s32 1, %s31
      %p37 = scmp.ge.s32.totalorder %s36, 1
      %s38 = scalar_select %p37, 0, %s36
      %s39 = sadd.s32 1, %s30
      %s40 = scalar_select %p37, %s39, %s30
      %p41 = scmp.ge.s32.totalorder %s40, 2
      %s42 = scalar_select %p41, 0, %s40
      %s43 = ssub.s32 %s30, %s42
      %s44 = ssub.s32 %s31, %s38
      %s45 = sor.u32 %s43, %s44
      %p46 = scmp.eq.s32.totalorder %s45, 0
      %s48 = sadd.s32 %s47, 1
      %s49 = scalar_select %p46, %s47, %s48
      %p52 = pneg %p46
      %p53 = scmp.eq.s32.totalorder %s23, 1
      %p54 = por %p52, %p53
      %p55 = scmp.ne.s32.totalorder %s47, %s50
      %p56 = scmp.eq.s32.totalorder %s23, 0
      %p57 = por %p55, %p56
      %p58 = scmp.ne.s32.totalorder %s47, %s50
      %p59 = scmp.eq.s32.totalorder %s28, 1
      %p60 = por %p58, %p59
      %p61 = scmp.ne.s32.totalorder %s50, %s51
      %p62 = scmp.eq.s32.totalorder %s28, 0
      %p63 = por %p61, %p62
      %p64 = scmp.ne.s32.totalorder %s50, %s51
      %p65 = scmp.eq.s32.totalorder %s29, 1
      %p66 = por %p64, %p65
      %p68 = scmp.ne.s32.totalorder %s51, %s67
      %p69 = scmp.eq.s32.totalorder %s29, 0
      %p70 = por %p68, %p69
      %s71 = ssub.s32 %s30, %s42
      %p72 = scmp.eq.s32.totalorder %s71, 0
      %s74 = sadd.s32 %s73, 1
      %s75 = scalar_select %p72, %s73, %s74
      %p78 = pneg %p72
      %p79 = scmp.eq.s32.totalorder %s23, 1
      %p80 = por %p78, %p79
      %p81 = scmp.ne.s32.totalorder %s73, %s76
      %p82 = scmp.eq.s32.totalorder %s23, 0
      %p83 = por %p81, %p82
      %p84 = scmp.ne.s32.totalorder %s73, %s76
      %p85 = scmp.eq.s32.totalorder %s28, 1
      %p86 = por %p84, %p85
      %p87 = scmp.ne.s32.totalorder %s76, %s77
      %p88 = scmp.eq.s32.totalorder %s28, 0
      %p89 = por %p87, %p88
      %p90 = scmp.ne.s32.totalorder %s76, %s77
      %p91 = scmp.eq.s32.totalorder %s29, 1
      %p92 = por %p90, %p91
      %p94 = scmp.ne.s32.totalorder %s77, %s93
      %p95 = scmp.eq.s32.totalorder %s29, 0
      %p96 = por %p94, %p95
      %s97 = ssub.s32 %s30, %s42
      %p98 = scmp.eq.s32.totalorder %s97, 0
      %s100 = sadd.s32 %s99, 1
      %s101 = scalar_select %p98, %s99, %s100
      %p104 = pneg %p98
      %p105 = scmp.eq.s32.totalorder %s23, 1
      %p106 = por %p104, %p105
      %p107 = scmp.ne.s32.totalorder %s99, %s102
      %p108 = scmp.eq.s32.totalorder %s23, 0
      %p109 = por %p107, %p108
      %p110 = scmp.ne.s32.totalorder %s99, %s102
      %p111 = scmp.eq.s32.totalorder %s28, 1
      %p112 = por %p110, %p111
      %p113 = scmp.ne.s32.totalorder %s102, %s103
      %p114 = scmp.eq.s32.totalorder %s28, 0
      %p115 = por %p113, %p114
      %p116 = scmp.ne.s32.totalorder %s102, %s103
      %p117 = scmp.eq.s32.totalorder %s29, 1
      %p118 = por %p116, %p117
      %p120 = scmp.ne.s32.totalorder %s103, %s119
      %p121 = scmp.eq.s32.totalorder %s29, 0
      %p122 = por %p120, %p121
      %s123 = ssub.s32 %s30, %s42
      %s124 = ssub.s32 %s31, %s38
      %s125 = sor.u32 %s123, %s124
      %p126 = scmp.eq.s32.totalorder %s125, 0
      %s128 = sadd.s32 %s127, 1
      %s129 = scalar_select %p126, %s127, %s128
      %p132 = pneg %p126
      %p133 = scmp.eq.s32.totalorder %s23, 1
      %p134 = por %p132, %p133
      %p135 = scmp.ne.s32.totalorder %s127, %s130
      %p136 = scmp.eq.s32.totalorder %s23, 0
      %p137 = por %p135, %p136
      %p138 = scmp.ne.s32.totalorder %s127, %s130
      %p139 = scmp.eq.s32.totalorder %s28, 1
      %p140 = por %p138, %p139
      %p141 = scmp.ne.s32.totalorder %s130, %s131
      %p142 = scmp.eq.s32.totalorder %s28, 0
      %p143 = por %p141, %p142
      %p144 = scmp.ne.s32.totalorder %s130, %s131
      %p145 = scmp.eq.s32.totalorder %s29, 1
      %p146 = por %p144, %p145
      %p148 = scmp.ne.s32.totalorder %s131, %s147
      %p149 = scmp.eq.s32.totalorder %s29, 0
      %p150 = por %p148, %p149
      %s151 = ssub.s32 %s30, %s42
      %s152 = ssub.s32 %s31, %s38
      %s153 = sor.u32 %s151, %s152
      %p154 = scmp.eq.s32.totalorder %s153, 0
      %s156 = sadd.s32 %s155, 1
      %s157 = scalar_select %p154, %s155, %s156
      %p160 = pneg %p154
      %p161 = scmp.eq.s32.totalorder %s23, 1
      %p162 = por %p160, %p161
      %p163 = scmp.ne.s32.totalorder %s155, %s158
      %p164 = scmp.eq.s32.totalorder %s23, 0
      %p165 = por %p163, %p164
      %p166 = scmp.ne.s32.totalorder %s155, %s158
      %p167 = scmp.eq.s32.totalorder %s28, 1
      %p168 = por %p166, %p167
      %p169 = scmp.ne.s32.totalorder %s158, %s159
      %p170 = scmp.eq.s32.totalorder %s28, 0
      %p171 = por %p169, %p170
      %p172 = scmp.ne.s32.totalorder %s158, %s159
      %p173 = scmp.eq.s32.totalorder %s29, 1
      %p174 = por %p172, %p173
      %p176 = scmp.ne.s32.totalorder %s159, %s175
      %p177 = scmp.eq.s32.totalorder %s29, 0
      %p178 = por %p176, %p177
      %p179 = scmp.le.s32.totalorder 1, %s23
      %p180 = scmp.lt.s32.totalorder %s23, 3
      %p181 = pnand %p179, %p180
      %p182 = pneg %p181
      // Predicated region
      $region9: #{tpu_custom_call.1} parent=5 // pred_check
        _
      $region10: #{tpu_custom_call.1} parent=5 // pred_check_branch
        %184 = sbr.rel (%p181) target = $region12
      $region11: #{tpu_custom_call.1} parent=5 // pred_region
        %s185 = ssub.s32 %s23, 1
      $region12: #{tpu_custom_call.1} parent=5 // pred_fallthru
        _
      %p186 = scmp.lt.s32.totalorder %s23, 2
      // Predicated region
      $region13: #{tpu_custom_call.1} parent=5 // pred_check
        %p187 = pneg %p186
      $region14: #{tpu_custom_call.1} parent=5 // pred_check_branch
        %189 = sbr.rel (%p187) target = $region16
      $region15: #{tpu_custom_call.1} parent=5 // pred_region
        // Predicated region
        $region17: #{tpu_custom_call.1} parent=15 // pred_check
          %p190 = pneg %p57
        $region18: #{tpu_custom_call.1} parent=15 // pred_check_branch
          %192 = sbr.rel (%p190) target = $region20
        $region19: #{tpu_custom_call.1} parent=15 // pred_region
          %s193 = sand.u32 %s47, 1
          %s194 = scalar_lea.sflag [#allocation3], %s193
          %s195 = sand.u32 %s47, 1
          %s196 = smul.addr %s195, 8
          %s197 = scalar_lea.vmem [#allocation2], %s196
          %s199 = ssub.s32 128, 128
          %200 = vsyncadd %s194, %s199
          %s201 = sadd.s32 %s31, %s30
          %s202 = smul.addr %s201, 128
          %s203 = scalar_lea.hbm %s0, %s202
          %s205 = sshll.u32 %s197, 4
          %s206 = int_to_ptr.vmem [resolvable:$true] %s205
          %208 = dma.hbm_to_vmem [thread:$0]  %s203, 128, %s206, %s194
        $region20: #{tpu_custom_call.1} parent=15 // pred_fallthru
          _
        // Predicated region
        $region21: #{tpu_custom_call.1} parent=15 // pred_check
          %p209 = pneg %p83
        $region22: #{tpu_custom_call.1} parent=15 // pred_check_branch
          %211 = sbr.rel (%p209) target = $region24
        $region23: #{tpu_custom_call.1} parent=15 // pred_region
          %s212 = sand.u32 %s23, 1
          %s213 = scalar_lea.sflag [#allocation6], %s212
          %s214 = sand.u32 %s73, 1
          %s215 = smul.addr %s214, 8
          %s216 = scalar_lea.vmem [#allocation5], %s215
          %s218 = ssub.s32 128, 128
          %219 = vsyncadd %s213, %s218
          %s220 = smul.addr %s30, 128
          %s221 = scalar_lea.hbm %s1, %s220
          %s223 = sshll.u32 %s216, 4
          %s224 = int_to_ptr.vmem [resolvable:$true] %s223
          %226 = dma.hbm_to_vmem [thread:$0]  %s221, 128, %s224, %s213
        $region24: #{tpu_custom_call.1} parent=15 // pred_fallthru
          _
        // Predicated region
        $region25: #{tpu_custom_call.1} parent=15 // pred_check
          %p227 = pneg %p109
        $region26: #{tpu_custom_call.1} parent=15 // pred_check_branch
          %229 = sbr.rel (%p227) target = $region28
        $region27: #{tpu_custom_call.1} parent=15 // pred_region
          %s230 = sand.u32 %s23, 1
          %s231 = scalar_lea.sflag [#allocation6], %s230
          %s232 = sand.u32 %s99, 1
          %s233 = smul.addr %s232, 8
          %s234 = scalar_lea.vmem [#allocation7], %s233
          %s236 = ssub.s32 128, 128
          %237 = vsyncadd %s231, %s236
          %s238 = smul.addr %s30, 128
          %s239 = scalar_lea.hbm %s2, %s238
          %s241 = sshll.u32 %s234, 4
          %s242 = int_to_ptr.vmem [resolvable:$true] %s241
          %244 = dma.hbm_to_vmem [thread:$0]  %s239, 128, %s242, %s231
        $region28: #{tpu_custom_call.1} parent=15 // pred_fallthru
          _
      $region16: #{tpu_custom_call.1} parent=5 // pred_fallthru
        _
      %p245 = scmp.le.s32.totalorder 1, %s23
      %p246 = scmp.lt.s32.totalorder %s23, 3
      %p247 = pnand %p245, %p246
      %p248 = pneg %p247
      // Predicated region
      $region29: #{tpu_custom_call.1} parent=5 // pred_check
        _
      $region30: #{tpu_custom_call.1} parent=5 // pred_check_branch
        %250 = sbr.rel (%p247) target = $region32
      $region31: #{tpu_custom_call.1} parent=5 // pred_region
        %s251 = ssub.s32 %s23, 1
        %s252 = sand.u32 %s50, 1
        %s253 = scalar_lea.sflag [#allocation3], %s252
        %s254 = sand.u32 %s50, 1
        %s255 = smul.addr %s254, 8
        %s256 = scalar_lea.vmem [#allocation2], %s255
        // Predicated region
        $region33: #{tpu_custom_call.1} parent=31 // pred_check
          %p257 = pneg %p63
        $region34: #{tpu_custom_call.1} parent=31 // pred_check_branch
          %259 = sbr.rel (%p257) target = $region36
        $region35: #{tpu_custom_call.1} parent=31 // pred_region
          %260 = dma.done %s253, 128
        $region36: #{tpu_custom_call.1} parent=31 // pred_fallthru
          _
        %s261 = sand.u32 %s28, 1
        %s262 = scalar_lea.sflag [#allocation6], %s261
        %s263 = sand.u32 %s76, 1
        %s264 = smul.addr %s263, 8
        %s265 = scalar_lea.vmem [#allocation5], %s264
        // Predicated region
        $region37: #{tpu_custom_call.1} parent=31 // pred_check
          %p266 = pneg %p89
        $region38: #{tpu_custom_call.1} parent=31 // pred_check_branch
          %268 = sbr.rel (%p266) target = $region40
        $region39: #{tpu_custom_call.1} parent=31 // pred_region
          %269 = dma.done %s262, 128
        $region40: #{tpu_custom_call.1} parent=31 // pred_fallthru
          _
        %s270 = sand.u32 %s28, 1
        %s271 = scalar_lea.sflag [#allocation6], %s270
        %s272 = sand.u32 %s102, 1
        %s273 = smul.addr %s272, 8
        %s274 = scalar_lea.vmem [#allocation7], %s273
        // Predicated region
        $region41: #{tpu_custom_call.1} parent=31 // pred_check
          %p275 = pneg %p115
        $region42: #{tpu_custom_call.1} parent=31 // pred_check_branch
          %277 = sbr.rel (%p275) target = $region44
        $region43: #{tpu_custom_call.1} parent=31 // pred_region
          %278 = dma.done %s271, 128
        $region44: #{tpu_custom_call.1} parent=31 // pred_fallthru
          _
        %s279 = sand.u32 %s50, 1
        %s280 = scalar_lea.sflag [#allocation3], %s279
        %s281 = sand.u32 %s50, 1
        %s282 = smul.addr %s281, 8
        %s283 = scalar_lea.vmem [#allocation2], %s282
        %p284 = pneg %p63
        %p285 = pneg %p60
        %s286 = sand.u32 %s28, 1
        %s287 = scalar_lea.sflag [#allocation6], %s286
        %s288 = sand.u32 %s76, 1
        %s289 = smul.addr %s288, 8
        %s290 = scalar_lea.vmem [#allocation5], %s289
        %p291 = pneg %p89
        %p292 = pneg %p86
        %s293 = sand.u32 %s28, 1
        %s294 = scalar_lea.sflag [#allocation6], %s293
        %s295 = sand.u32 %s102, 1
        %s296 = smul.addr %s295, 8
        %s297 = scalar_lea.vmem [#allocation7], %s296
        %p298 = pneg %p115
        %p299 = pneg %p112
        %p300 = pneg %p143
        %p301 = pneg %p140
        %s302 = sand.u32 %s130, 1
        %s303 = scalar_lea.sflag [#allocation4], %s302
        %s304 = sand.u32 %s130, 1
        %s305 = smul.addr %s304, 8
        %s306 = scalar_lea.vmem [#allocation8], %s305
        %p307 = pneg %p171
        %p308 = pneg %p168
        %s309 = sand.u32 %s158, 1
        %s310 = scalar_lea.sflag [#allocation10], %s309
        %s311 = sand.u32 %s158, 1
        %s312 = smul.addr %s311, 8
        %s313 = scalar_lea.vmem [#allocation9], %s312
        %v314 = vld [vmem:[%s256] sm:$0xff]
        %v315 = vld [vmem:[%s265] sm:$0xff]
        %v316 = vld [vmem:[%s274] sm:$0xff]
        %vm317 = vcmask 261120
        %v319 = vsel %vm317, %v314, 0
        %v322 = vsel %vm317, %v315, 0
        %324 = vmatprep.subr.mxu0 0.0
        %325 = vmatpush1.xpose.msra.mxu0 0.0
        %326 = vmatprep.subr.mxu0 0.0
        %327 = vmatpush1.xpose.msra.mxu0 0.0
        %328 = vmatprep.subr.mxu0 0.0
        %329 = vmatpush1.xpose.msra.mxu0 0.0
        %330 = vmatprep.subr.mxu0 0.0
        %331 = vmatpush1.xpose.msra.mxu0 0.0
        %332 = vmatprep.subr.mxu0 0.0
        %333 = vmatpush1.xpose.msra.mxu0 0.0
        %334 = vmatprep.subr.mxu0 0.0
        %335 = vmatpush1.xpose.msra.mxu0 0.0
        %336 = vmatprep.subr.mxu0 0.0
        %337 = vmatpush1.xpose.msra.mxu0 0.0
        %338 = vmatprep.subr.mxu0 0.0
        %339 = vmatpush1.xpose.msra.mxu0 0.0
        %340 = vmatprep.subr.mxu0 0.0
        %341 = vmatpush1.xpose.msra.mxu0 0.0
        %342 = vmatprep.subr.mxu0 0.0
        %343 = vmatpush1.xpose.msra.mxu0 0.0
        %344 = vmatprep.subr.mxu0 0.0
        %345 = vmatpush1.xpose.msra.mxu0 0.0
        %346 = vmatprep.subr.mxu0 0.0
        %347 = vmatpush1.xpose.msra.mxu0 0.0
        %348 = vmatprep.subr.mxu0 0.0
        %349 = vmatpush1.xpose.msra.mxu0 0.0
        %350 = vmatprep.subr.mxu0 0.0
        %351 = vmatpush1.xpose.msra.mxu0 0.0
        %352 = vmatprep.subr.mxu0 0.0
        %353 = vmatpush1.xpose.msra.mxu0 0.0
        %354 = vmatprep.subr.mxu0 0.0
        %355 = vmatpush1.xpose.msra.mxu0 %v322
        %356 = vmatprep.subr.mxu0 0.0
        %357 = vmatpush2.xpose.msra.mxu0 0.0
        %358 = vmatprep.subr.mxu0 0.0
        %359 = vmatpush2.xpose.msra.mxu0 0.0
        %360 = vmatprep.subr.mxu0 0.0
        %361 = vmatpush2.xpose.msra.mxu0 0.0
        %362 = vmatprep.subr.mxu0 0.0
        %363 = vmatpush2.xpose.msra.mxu0 0.0
        %364 = vmatprep.subr.mxu0 0.0
        %365 = vmatpush2.xpose.msra.mxu0 0.0
        %366 = vmatprep.subr.mxu0 0.0
        %367 = vmatpush2.xpose.msra.mxu0 0.0
        %368 = vmatprep.subr.mxu0 0.0
        %369 = vmatpush2.xpose.msra.mxu0 0.0
        %370 = vmatprep.subr.mxu0 0.0
        %371 = vmatpush2.xpose.msra.mxu0 0.0
        %372 = vmatprep.subr.mxu0 0.0
        %373 = vmatpush2.xpose.msra.mxu0 0.0
        %374 = vmatprep.subr.mxu0 0.0
        %375 = vmatpush2.xpose.msra.mxu0 0.0
        %376 = vmatprep.subr.mxu0 0.0
        %377 = vmatpush2.xpose.msra.mxu0 0.0
        %378 = vmatprep.subr.mxu0 0.0
        %379 = vmatpush2.xpose.msra.mxu0 0.0
        %380 = vmatprep.subr.mxu0 0.0
        %381 = vmatpush2.xpose.msra.mxu0 0.0
        %382 = vmatprep.subr.mxu0 0.0
        %383 = vmatpush2.xpose.msra.mxu0 0.0
        %384 = vmatprep.subr.mxu0 0.0
        %385 = vmatpush2.xpose.msra.mxu0 0.0
        %386 = vmatprep.subr.mxu0 0.0
        %387 = vmatpush2.xpose.msra.mxu0 0.0
        %388 = vmatprep.mubr.f32.mxu0 0.0
        %389 = vmatmul.mubr.f32.gmra.mxu0 %v319
        %v390 = vpop.f32.mrf.mxu0
        %v391 = vadd.f32 0.0, %v390
        %v392 = vpop.f32.mrf.mxu0
        %393 = vdwg.mxu0
        %vm394 = vcmask 64512
        %v395 = vsel %vm394, %v391, -inf
        %396 = vmax.xlane.f32.xlu0 %v395
        %v397 = vpop.xlane.xlu0 %396
        %v398 = vsub.f32 %v391, %v397
        %v399 = vmul.f32 %v398, 1.442695
        %v400 = vpow.pop %v399
        %v401 = vsel %vm394, %v400, 0.0
        %402 = vadd.xlane.f32.xlu0 %v401
        %v403 = vpop.xlane.xlu0 %402
        %v404 = vrcp.pop %v403
        %v405 = vmul.f32 %v400, %v404
        %406 = vst.msk [vmem:[%s313] sm:$0xff] %vm394, %v405
        %v408 = vsel %vm394, %v405, 0
        %410 = vmatprep.subr.mxu0 0.0
        %411 = vmatpush1.msra.mxu0 0.0
        %412 = vmatprep.subr.mxu0 0.0
        %413 = vmatpush1.msra.mxu0 0.0
        %414 = vmatprep.subr.mxu0 0.0
        %415 = vmatpush1.msra.mxu0 0.0
        %416 = vmatprep.subr.mxu0 0.0
        %417 = vmatpush1.msra.mxu0 0.0
        %418 = vmatprep.subr.mxu0 0.0
        %419 = vmatpush1.msra.mxu0 0.0
        %420 = vmatprep.subr.mxu0 0.0
        %421 = vmatpush1.msra.mxu0 0.0
        %422 = vmatprep.subr.mxu0 0.0
        %423 = vmatpush1.msra.mxu0 0.0
        %424 = vmatprep.subr.mxu0 0.0
        %425 = vmatpush1.msra.mxu0 0.0
        %426 = vmatprep.subr.mxu0 0.0
        %427 = vmatpush1.msra.mxu0 0.0
        %428 = vmatprep.subr.mxu0 0.0
        %429 = vmatpush1.msra.mxu0 0.0
        %430 = vmatprep.subr.mxu0 0.0
        %431 = vmatpush1.msra.mxu0 0.0
        %432 = vmatprep.subr.mxu0 0.0
        %433 = vmatpush1.msra.mxu0 0.0
        %434 = vmatprep.subr.mxu0 0.0
        %435 = vmatpush1.msra.mxu0 0.0
        %436 = vmatprep.subr.mxu0 0.0
        %437 = vmatpush1.msra.mxu0 0.0
        %438 = vmatprep.subr.mxu0 0.0
        %439 = vmatpush1.msra.mxu0 0.0
        %440 = vmatprep.subr.mxu0 0.0
        %441 = vmatpush1.msra.mxu0 %v316
        %442 = vmatprep.subr.mxu0 0.0
        %443 = vmatpush2.msra.mxu0 0.0
        %444 = vmatprep.subr.mxu0 0.0
        %445 = vmatpush2.msra.mxu0 0.0
        %446 = vmatprep.subr.mxu0 0.0
        %447 = vmatpush2.msra.mxu0 0.0
        %448 = vmatprep.subr.mxu0 0.0
        %449 = vmatpush2.msra.mxu0 0.0
        %450 = vmatprep.subr.mxu0 0.0
        %451 = vmatpush2.msra.mxu0 0.0
        %452 = vmatprep.subr.mxu0 0.0
        %453 = vmatpush2.msra.mxu0 0.0
        %454 = vmatprep.subr.mxu0 0.0
        %455 = vmatpush2.msra.mxu0 0.0
        %456 = vmatprep.subr.mxu0 0.0
        %457 = vmatpush2.msra.mxu0 0.0
        %458 = vmatprep.subr.mxu0 0.0
        %459 = vmatpush2.msra.mxu0 0.0
        %460 = vmatprep.subr.mxu0 0.0
        %461 = vmatpush2.msra.mxu0 0.0
        %462 = vmatprep.subr.mxu0 0.0
        %463 = vmatpush2.msra.mxu0 0.0
        %464 = vmatprep.subr.mxu0 0.0
        %465 = vmatpush2.msra.mxu0 0.0
        %466 = vmatprep.subr.mxu0 0.0
        %467 = vmatpush2.msra.mxu0 0.0
        %468 = vmatprep.subr.mxu0 0.0
        %469 = vmatpush2.msra.mxu0 0.0
        %470 = vmatprep.subr.mxu0 0.0
        %471 = vmatpush2.msra.mxu0 0.0
        %472 = vmatprep.subr.mxu0 0.0
        %473 = vmatpush2.msra.mxu0 0.0
        %474 = vmatprep.mubr.f32.mxu0 0.0
        %475 = vmatmul.mubr.f32.gmra.mxu0 %v408
        %v476 = vpop.f32.mrf.mxu0
        %v477 = vadd.f32 0.0, %v476
        %v478 = vpop.f32.mrf.mxu0
        %479 = vdwg.mxu0
        %480 = vst.msk [vmem:[%s306] sm:$0xff] %vm317, %v477
        %s481 = sand.u32 %s130, 1
        %s482 = scalar_lea.sflag [#allocation4], %s481
        %s483 = sand.u32 %s130, 1
        %s484 = smul.addr %s483, 8
        %s485 = scalar_lea.vmem [#allocation8], %s484
        %s486 = sand.u32 %s158, 1
        %s487 = scalar_lea.sflag [#allocation10], %s486
        %s488 = sand.u32 %s158, 1
        %s489 = smul.addr %s488, 8
        %s490 = scalar_lea.vmem [#allocation9], %s489
        // Predicated region
        $region45: #{tpu_custom_call.1} parent=31 // pred_check
          %p491 = pneg %p140
        $region46: #{tpu_custom_call.1} parent=31 // pred_check_branch
          %493 = sbr.rel (%p491) target = $region48
        $region47: #{tpu_custom_call.1} parent=31 // pred_region
          %s495 = ssub.s32 128, 128
          %496 = vsyncadd %s482, %s495
          %s497 = sadd.s32 %s33, %s32
          %s498 = smul.addr %s497, 128
          %s499 = scalar_lea.hbm %s3, %s498
          %s501 = sshll.u32 %s485, 4
          %s502 = int_to_ptr.vmem [resolvable:$true] %s501
          %504 = dma.vmem_to_hbm [thread:$0]  %s502, 128, %s499, %s482
        $region48: #{tpu_custom_call.1} parent=31 // pred_fallthru
          _
        // Predicated region
        $region49: #{tpu_custom_call.1} parent=31 // pred_check
          %p505 = pneg %p168
        $region50: #{tpu_custom_call.1} parent=31 // pred_check_branch
          %507 = sbr.rel (%p505) target = $region52
        $region51: #{tpu_custom_call.1} parent=31 // pred_region
          %s509 = ssub.s32 128, 128
          %510 = vsyncadd %s487, %s509
          %s511 = sadd.s32 %s33, %s32
          %s512 = smul.addr %s511, 128
          %s513 = scalar_lea.hbm %s4, %s512
          %s515 = sshll.u32 %s490, 4
          %s516 = int_to_ptr.vmem [resolvable:$true] %s515
          %518 = dma.vmem_to_hbm [thread:$0]  %s516, 128, %s513, %s487
        $region52: #{tpu_custom_call.1} parent=31 // pred_fallthru
          _
      $region32: #{tpu_custom_call.1} parent=5 // pred_fallthru
        _
      %p519 = scmp.le.s32.totalorder 2, %s23
      // Predicated region
      $region53: #{tpu_custom_call.1} parent=5 // pred_check
        %p520 = pneg %p519
      $region54: #{tpu_custom_call.1} parent=5 // pred_check_branch
        %522 = sbr.rel (%p520) target = $region56
      $region55: #{tpu_custom_call.1} parent=5 // pred_region
        %s523 = ssub.s32 %s23, 2
        // Predicated region
        $region57: #{tpu_custom_call.1} parent=55 // pred_check
          %p524 = pneg %p146
        $region58: #{tpu_custom_call.1} parent=55 // pred_check_branch
          %526 = sbr.rel (%p524) target = $region60
        $region59: #{tpu_custom_call.1} parent=55 // pred_region
          %s527 = sand.u32 %s131, 1
          %s528 = scalar_lea.sflag [#allocation4], %s527
          %s529 = sand.u32 %s131, 1
          %s530 = smul.addr %s529, 8
          %s531 = scalar_lea.vmem [#allocation8], %s530
          %532 = dma.done %s528, 128
        $region60: #{tpu_custom_call.1} parent=55 // pred_fallthru
          _
        // Predicated region
        $region61: #{tpu_custom_call.1} parent=55 // pred_check
          %p533 = pneg %p174
        $region62: #{tpu_custom_call.1} parent=55 // pred_check_branch
          %535 = sbr.rel (%p533) target = $region64
        $region63: #{tpu_custom_call.1} parent=55 // pred_region
          %s536 = sand.u32 %s159, 1
          %s537 = scalar_lea.sflag [#allocation10], %s536
          %s538 = sand.u32 %s159, 1
          %s539 = smul.addr %s538, 8
          %s540 = scalar_lea.vmem [#allocation9], %s539
          %541 = dma.done %s537, 128
        $region64: #{tpu_custom_call.1} parent=55 // pred_fallthru
          _
      $region56: #{tpu_custom_call.1} parent=5 // pred_fallthru
        _
    $region6: #{tpu_custom_call.1} parent=1 // loop_footer
      %s27 = sadd.s32 1, %s23
    $region7: #{tpu_custom_call.1} parent=1 // loop_footer_branch
      %22 = sbr.rel target = $region3
    $region8: #{tpu_custom_call.1} parent=1 // loop_exit
      _
    %542 = vsyncpa [#allocation3], 1
    %s543 = scalar_lea.sflag [#allocation3], 1
    %544 = vsyncpa %s543, 1
    %545 = vsyncpa [#allocation6], 1
    %s546 = scalar_lea.sflag [#allocation6], 1
    %547 = vsyncpa %s546, 1
    %548 = vsyncpa [#allocation4], 1
    %s549 = scalar_lea.sflag [#allocation4], 1
    %550 = vsyncpa %s549, 1
    %551 = vsyncpa [#allocation10], 1
    %s552 = scalar_lea.sflag [#allocation10], 1
    %553 = vsyncpa %s552, 1

</llo_original>
